<compile_context>
chip_gen: v6e
topology: v6e:2x2x1
jax: 0.10.0
libtpu: 0.0.40
codegen_flags: <defaults>
</compile_context>

<pallas_src>
import jax
import jax.numpy as jnp
from jax.experimental import pallas as pl
from jax.experimental.pallas import tpu as pltpu


def _round_up(n, m):
    return ((n + m - 1) // m) * m


def _cdiv(a, b):
    return (a + b - 1) // b


def _mlp_kernel(x_ref, w1_ref, b1_ref, w2_ref, b2_ref, o_ref):
    # z1 = x @ W1 + b1   (MXU, f32 accumulate)
    z1 = jnp.dot(x_ref[...], w1_ref[...], preferred_element_type=jnp.float32)
    z1 = z1 + b1_ref[...]                      # (TB,H) + (1,H)
    # exact sigmoid (same formula as the reference): exp on EUP, one f32 divide
    a1 = 1.0 / (1.0 + jnp.exp(-z1))
    # z2 = a1 @ W2 + b2
    z2 = jnp.dot(a1, w2_ref[...], preferred_element_type=jnp.float32)
    z2 = z2 + b2_ref[...]                      # (TB,C) + (1,C)
    o_ref[...] = 1.0 / (1.0 + jnp.exp(-z2))


def my_model_forward(x, w1, b1, w2, b2, *, batch_tile=4096):
    """Pallas implementation of MyModel.forward.

    x:  (B, num_feature) float32
    w1: (num_feature, hidden_dim), b1: (hidden_dim,)
    w2: (hidden_dim, num_class),   b2: (num_class,)
    returns (B, num_class) float32
    """
    B, F = x.shape
    H = w1.shape[1]
    C = w2.shape[1]

    xf = x.astype(jnp.float32)
    w1f = w1.astype(jnp.float32)
    b1f = b1.reshape(1, H).astype(jnp.float32)
    w2f = w2.astype(jnp.float32)
    b2f = b2.reshape(1, C).astype(jnp.float32)

    cost = pl.CostEstimate(
        flops=2 * B * F * H + 2 * B * H * C,
        transcendentals=B * (H + C),           # one exp per activation element
        bytes_accessed=4 * (B * F + F * H + H + H * C + C + B * C),
    )

    if B <= 512:
        # Small batch: single un-pipelined call, everything resident in VMEM.
        return pl.pallas_call(
            _mlp_kernel,
            out_shape=jax.ShapeDtypeStruct((B, C), jnp.float32),
            in_specs=[pl.BlockSpec(memory_space=pltpu.MemorySpace.VMEM)] * 5,
            out_specs=pl.BlockSpec(memory_space=pltpu.MemorySpace.VMEM),
            cost_estimate=cost,
        )(xf, w1f, b1f, w2f, b2f)

    # Large batch: tile the batch axis (weights/biases resident via constant
    # index_map, activations streamed with BlockSpec pipelining).
    # Cap the tile so the "parallel" grid has >= 4 steps (>= 2 per v7x TensorCore);
    # keep it a multiple of 8 for the sublane rule.
    tb_cap = _round_up(_cdiv(B, 4), 8)
    TB = max(8, min(batch_tile, tb_cap))
    grid = (_cdiv(B, TB),)                      # ragged last tile handled by Pallas

    return pl.pallas_call(
        _mlp_kernel,
        out_shape=jax.ShapeDtypeStruct((B, C), jnp.float32),
        grid=grid,
        in_specs=[
            pl.BlockSpec((TB, F), lambda i: (i, 0)),   # activations stream
            pl.BlockSpec((F, H), lambda i: (0, 0)),    # W1 resident
            pl.BlockSpec((1, H), lambda i: (0, 0)),    # b1 resident
            pl.BlockSpec((H, C), lambda i: (0, 0)),    # W2 resident
            pl.BlockSpec((1, C), lambda i: (0, 0)),    # b2 resident
        ],
        out_specs=pl.BlockSpec((TB, C), lambda i: (i, 0)),   # only C valid columns
        compiler_params=pltpu.CompilerParams(
            dimension_semantics=("parallel",),          # v7x: shard batch over 2 TCs
        ),
        cost_estimate=cost,
    )(xf, w1f, b1f, w2f, b2f)


def my_model_ref(x, w1, b1, w2, b2):
    z1 = x @ w1 + b1
    a1 = 1.0 / (1.0 + jnp.exp(-z1))
    z2 = a1 @ w2 + b2
    return 1.0 / (1.0 + jnp.exp(-z2))


if __name__ == "__main__":
    # Module-consistent shapes: batch=8, num_feature=32, hidden_dim=32, num_class=16
    B, F, H, C = 8, 32, 32, 16
    key = jax.random.PRNGKey(0)
    kx, kw1, kb1, kw2, kb2 = jax.random.split(key, 5)

    x = jax.random.normal(kx, (B, F), dtype=jnp.float32)
    # Deterministic "torch.randn"-like parameter init via jax.random.normal.
    w1 = jax.random.normal(kw1, (F, H), dtype=jnp.float32)
    b1 = jax.random.normal(kb1, (H,), dtype=jnp.float32)
    w2 = jax.random.normal(kw2, (H, C), dtype=jnp.float32)
    b2 = jax.random.normal(kb2, (C,), dtype=jnp.float32)

    # Small-batch (single VMEM-resident call) path.
    out = jax.block_until_ready(my_model_forward(x, w1, b1, w2, b2))
    ref = my_model_ref(x, w1, b1, w2, b2)
    assert out.shape == (B, C)
    assert jnp.allclose(out, ref, atol=1e-4, rtol=1e-4), "mismatch (small path)"

    # Batch-tiled streaming path (grid of 4 parallel steps).
    B2 = 4096
    x2 = jax.random.normal(jax.random.PRNGKey(1), (B2, F), dtype=jnp.float32)
    out2 = jax.block_until_ready(my_model_forward(x2, w1, b1, w2, b2))
    ref2 = my_model_ref(x2, w1, b1, w2, b2)
    assert out2.shape == (B2, C)
    assert jnp.allclose(out2, ref2, atol=1e-4, rtol=1e-4), "mismatch (tiled path)"

    # Streaming path with a ragged last tile (no host-side pad/slice copies).
    B3 = 1000
    x3 = jax.random.normal(jax.random.PRNGKey(2), (B3, F), dtype=jnp.float32)
    out3 = jax.block_until_ready(my_model_forward(x3, w1, b1, w2, b2))
    ref3 = my_model_ref(x3, w1, b1, w2, b2)
    assert out3.shape == (B3, C)
    assert jnp.allclose(out3, ref3, atol=1e-4, rtol=1e-4), "mismatch (ragged path)"

    print("KERNEL_OK")
</pallas_src>

<mosaic_0001>
module attributes {stable_mosaic.version = 11 : i64} {
  func.func @_mlp_kernel(%arg0: memref<8x32xf32, #tpu.memory_space<vmem>>, %arg1: memref<32x32xf32, #tpu.memory_space<vmem>>, %arg2: memref<1x32xf32, #tpu.memory_space<vmem>>, %arg3: memref<32x16xf32, #tpu.memory_space<vmem>>, %arg4: memref<1x16xf32, #tpu.memory_space<vmem>>, %arg5: memref<8x16xf32, #tpu.memory_space<vmem>>) attributes {dimension_semantics = [], scalar_prefetch = 0 : i64, scratch_operands = 0 : i64, tpu.core_type = #tpu.core_type<tc>} {
    %c0 = arith.constant 0 : index
    %c0_0 = arith.constant 0 : index
    %0 = vector.load %arg0[%c0, %c0_0] : memref<8x32xf32, #tpu.memory_space<vmem>>, vector<8x32xf32>
    %c0_1 = arith.constant 0 : index
    %c0_2 = arith.constant 0 : index
    %1 = vector.load %arg1[%c0_1, %c0_2] : memref<32x32xf32, #tpu.memory_space<vmem>>, vector<32x32xf32>
    %cst = arith.constant dense<0.000000e+00> : vector<8x32xf32>
    %2 = tpu.matmul %0, %1, %cst {dimension_numbers = #tpu.dot_dimension_numbers<[1], [0], [0], [1], [0, 0, 1, 1], [], []>} : vector<8x32xf32>, vector<32x32xf32>, vector<8x32xf32> -> vector<8x32xf32>
    %c0_3 = arith.constant 0 : index
    %c0_4 = arith.constant 0 : index
    %3 = vector.load %arg2[%c0_3, %c0_4] : memref<1x32xf32, #tpu.memory_space<vmem>>, vector<1x32xf32>
    %4 = vector.broadcast %3 : vector<1x32xf32> to vector<8x32xf32>
    %5 = arith.addf %2, %4 : vector<8x32xf32>
    %cst_5 = arith.constant 0.000000e+00 : f32
    %6 = vector.broadcast %cst_5 : f32 to vector<8x32xf32>
    %7 = arith.subf %6, %5 : vector<8x32xf32>
    %8 = math.exp %7 : vector<8x32xf32>
    %cst_6 = arith.constant 1.000000e+00 : f32
    %9 = vector.broadcast %cst_6 : f32 to vector<8x32xf32>
    %10 = arith.addf %9, %8 : vector<8x32xf32>
    %cst_7 = arith.constant 1.000000e+00 : f32
    %11 = vector.broadcast %cst_7 : f32 to vector<8x32xf32>
    %12 = arith.divf %11, %10 : vector<8x32xf32>
    %c0_8 = arith.constant 0 : index
    %c0_9 = arith.constant 0 : index
    %13 = vector.load %arg3[%c0_8, %c0_9] : memref<32x16xf32, #tpu.memory_space<vmem>>, vector<32x16xf32>
    %cst_10 = arith.constant dense<0.000000e+00> : vector<8x16xf32>
    %14 = tpu.matmul %12, %13, %cst_10 {dimension_numbers = #tpu.dot_dimension_numbers<[1], [0], [0], [1], [0, 0, 1, 1], [], []>} : vector<8x32xf32>, vector<32x16xf32>, vector<8x16xf32> -> vector<8x16xf32>
    %c0_11 = arith.constant 0 : index
    %c0_12 = arith.constant 0 : index
    %15 = vector.load %arg4[%c0_11, %c0_12] : memref<1x16xf32, #tpu.memory_space<vmem>>, vector<1x16xf32>
    %16 = vector.broadcast %15 : vector<1x16xf32> to vector<8x16xf32>
    %17 = arith.addf %14, %16 : vector<8x16xf32>
    %cst_13 = arith.constant 0.000000e+00 : f32
    %18 = vector.broadcast %cst_13 : f32 to vector<8x16xf32>
    %19 = arith.subf %18, %17 : vector<8x16xf32>
    %20 = math.exp %19 : vector<8x16xf32>
    %cst_14 = arith.constant 1.000000e+00 : f32
    %21 = vector.broadcast %cst_14 : f32 to vector<8x16xf32>
    %22 = arith.addf %21, %20 : vector<8x16xf32>
    %cst_15 = arith.constant 1.000000e+00 : f32
    %23 = vector.broadcast %cst_15 : f32 to vector<8x16xf32>
    %24 = arith.divf %23, %22 : vector<8x16xf32>
    %c0_16 = arith.constant 0 : index
    %c0_17 = arith.constant 0 : index
    %25 = vector.load %arg5[%c0_16, %c0_17] : memref<8x16xf32, #tpu.memory_space<vmem>>, vector<8x16xf32>
    tpu.vector_store %arg5[%c0_16, %c0_17], %24 {strides = array<i32>} : memref<8x16xf32, #tpu.memory_space<vmem>>, vector<8x16xf32>,
    return
  }
}

</mosaic_0001>

<llo_original>
// kernel: tpu_custom_call.1
$region0: #{tpu_custom_call.1}
  #allocation0 [shape = 'u32[]', space=smem, size = 0x4, offset = 0x4, fixed_abs, tag = 'smem constant byte address 0x4 - core index']
  #allocation1 [shape = 'u32[144,128]{1,0:T(1,128)}', space=vmem, size = 0x12000, scoped, tag = 'internal scratch']
  %s0 = inlined_call_operand.vmem [shape: f32[8,32], index: 0, kind: input, shape index: {}]
  %s1 = inlined_call_operand.vmem [shape: f32[32,32], index: 1, kind: input, shape index: {}]
  %s2 = inlined_call_operand.vmem [shape: f32[1,32], index: 2, kind: input, shape index: {}]
  %s3 = inlined_call_operand.vmem [shape: f32[32,16], index: 3, kind: input, shape index: {}]
  %s4 = inlined_call_operand.vmem [shape: f32[1,16], index: 4, kind: input, shape index: {}]
  %s5 = inlined_call_operand.hbm [shape: f32[8,16], index: 5, kind: output, shape index: {}]
  %s6 = sld [smem:[#allocation0]]
  $region30: #{tpu_custom_call.1} parent=0
    _
  %s8 = ssub.s32 1, %s6
  %s9 = scalar_select 0, %s8, %s6
  $region1: #{tpu_custom_call.1} parent=0
    #allocation2 [shape = 'u8[4096]{0}', space=vmem, size = 0x1000, scoped, tag = 'output window, operand 0, single buffered']
    #allocation3 [shape = 's32[1]{0}', space=sflag, size = 0x4, scoped, tag = 'scoped memory for tpu_custom_call.1']
    %10 = vsyncpa [#allocation3], 0
    // Predicated region
    $region2: #{tpu_custom_call.1} parent=1 // pred_check
      _
    $region3: #{tpu_custom_call.1} parent=1 // pred_check_branch
      %12 = sbr.rel (0) target = $region5
    $region4: #{tpu_custom_call.1} parent=1 // pred_region
      _
    $region5: #{tpu_custom_call.1} parent=1 // pred_fallthru
      _
    // Predicated region
    $region6: #{tpu_custom_call.1} parent=1 // pred_check
      _
    $region7: #{tpu_custom_call.1} parent=1 // pred_check_branch
      %14 = sbr.rel (0) target = $region9
    $region8: #{tpu_custom_call.1} parent=1 // pred_region
      _
    $region9: #{tpu_custom_call.1} parent=1 // pred_fallthru
      _
    // Predicated region
    $region10: #{tpu_custom_call.1} parent=1 // pred_check
      _
    $region11: #{tpu_custom_call.1} parent=1 // pred_check_branch
      %16 = sbr.rel (0) target = $region13
    $region12: #{tpu_custom_call.1} parent=1 // pred_region
      _
    $region13: #{tpu_custom_call.1} parent=1 // pred_fallthru
      _
    // Predicated region
    $region14: #{tpu_custom_call.1} parent=1 // pred_check
      _
    $region15: #{tpu_custom_call.1} parent=1 // pred_check_branch
      %18 = sbr.rel (0) target = $region17
    $region16: #{tpu_custom_call.1} parent=1 // pred_region
      _
    $region17: #{tpu_custom_call.1} parent=1 // pred_fallthru
      _
    // Predicated region
    $region18: #{tpu_custom_call.1} parent=1 // pred_check
      _
    $region19: #{tpu_custom_call.1} parent=1 // pred_check_branch
      %20 = sbr.rel (0) target = $region21
    $region20: #{tpu_custom_call.1} parent=1 // pred_region
      _
    $region21: #{tpu_custom_call.1} parent=1 // pred_fallthru
      _
    %v21 = vld [vmem:[%s0] sm:$0xff]
    %v22 = vld [vmem:[%s1] sm:$0xff]
    %v23 = vld [vmem:[%s1 + $0x8] sm:$0xff]
    %v24 = vld [vmem:[%s1 + $0x10] sm:$0xff]
    %v25 = vld [vmem:[%s1 + $0x18] sm:$0xff]
    %v26 = vld [vmem:[%s2] sm:$0x1]
    %v28 = vlaneseq
    %v29 = vshrl.u32 %v28, 7
    %v30 = vsub.s32 0, %v29
    %v31 = vrot.slane %v26, %v30
    %vm33 = vcmask 261120
    %v35 = vsel %vm33, %v21, 0
    %37 = vmatprep.subr.mxu0 0.0
    %38 = vmatpush1.msra.mxu0 0.0
    %39 = vmatprep.subr.mxu0 0.0
    %40 = vmatpush1.msra.mxu0 0.0
    %41 = vmatprep.subr.mxu0 0.0
    %42 = vmatpush1.msra.mxu0 0.0
    %43 = vmatprep.subr.mxu0 0.0
    %44 = vmatpush1.msra.mxu0 0.0
    %45 = vmatprep.subr.mxu0 0.0
    %46 = vmatpush1.msra.mxu0 0.0
    %47 = vmatprep.subr.mxu0 0.0
    %48 = vmatpush1.msra.mxu0 0.0
    %49 = vmatprep.subr.mxu0 0.0
    %50 = vmatpush1.msra.mxu0 0.0
    %51 = vmatprep.subr.mxu0 0.0
    %52 = vmatpush1.msra.mxu0 0.0
    %53 = vmatprep.subr.mxu0 0.0
    %54 = vmatpush1.msra.mxu0 0.0
    %55 = vmatprep.subr.mxu0 0.0
    %56 = vmatpush1.msra.mxu0 0.0
    %57 = vmatprep.subr.mxu0 0.0
    %58 = vmatpush1.msra.mxu0 0.0
    %59 = vmatprep.subr.mxu0 0.0
    %60 = vmatpush1.msra.mxu0 0.0
    %61 = vmatprep.subr.mxu0 0.0
    %62 = vmatpush1.msra.mxu0 %v25
    %63 = vmatprep.subr.mxu0 0.0
    %64 = vmatpush1.msra.mxu0 %v24
    %65 = vmatprep.subr.mxu0 0.0
    %66 = vmatpush1.msra.mxu0 %v23
    %67 = vmatprep.subr.mxu0 0.0
    %68 = vmatpush1.msra.mxu0 %v22
    %69 = vmatprep.subr.mxu0 0.0
    %70 = vmatpush2.msra.mxu0 0.0
    %71 = vmatprep.subr.mxu0 0.0
    %72 = vmatpush2.msra.mxu0 0.0
    %73 = vmatprep.subr.mxu0 0.0
    %74 = vmatpush2.msra.mxu0 0.0
    %75 = vmatprep.subr.mxu0 0.0
    %76 = vmatpush2.msra.mxu0 0.0
    %77 = vmatprep.subr.mxu0 0.0
    %78 = vmatpush2.msra.mxu0 0.0
    %79 = vmatprep.subr.mxu0 0.0
    %80 = vmatpush2.msra.mxu0 0.0
    %81 = vmatprep.subr.mxu0 0.0
    %82 = vmatpush2.msra.mxu0 0.0
    %83 = vmatprep.subr.mxu0 0.0
    %84 = vmatpush2.msra.mxu0 0.0
    %85 = vmatprep.subr.mxu0 0.0
    %86 = vmatpush2.msra.mxu0 0.0
    %87 = vmatprep.subr.mxu0 0.0
    %88 = vmatpush2.msra.mxu0 0.0
    %89 = vmatprep.subr.mxu0 0.0
    %90 = vmatpush2.msra.mxu0 0.0
    %91 = vmatprep.subr.mxu0 0.0
    %92 = vmatpush2.msra.mxu0 0.0
    %93 = vmatprep.subr.mxu0 0.0
    %94 = vmatpush2.msra.mxu0 0.0
    %95 = vmatprep.subr.mxu0 0.0
    %96 = vmatpush2.msra.mxu0 0.0
    %97 = vmatprep.subr.mxu0 0.0
    %98 = vmatpush2.msra.mxu0 0.0
    %99 = vmatprep.subr.mxu0 0.0
    %100 = vmatpush2.msra.mxu0 0.0
    %101 = vmatprep.mubr.f32.mxu0 0.0
    %102 = vmatmul.mubr.f32.gmra.mxu0 %v35
    %v103 = vpop.f32.mrf.mxu0
    %v104 = vadd.f32 %v31, %v103
    %v105 = vpop.f32.mrf.mxu0
    %106 = vdwg.mxu0
    %v107 = vsub.f32 0.0, %v104
    %v108 = vmul.f32 %v107, 1.442695
    %v109 = vpow.pop %v108
    %v110 = vadd.f32 %v109, 1.0
    %v111 = vrcp.pop %v110
    %v112 = vmul.f32 1.0, %v111
    %v113 = vld [vmem:[%s3] sm:$0xff]
    %v114 = vld [vmem:[%s3 + $0x8] sm:$0xff]
    %v115 = vld [vmem:[%s3 + $0x10] sm:$0xff]
    %v116 = vld [vmem:[%s3 + $0x18] sm:$0xff]
    %v117 = vld [vmem:[%s4] sm:$0x1]
    %v119 = vlaneseq
    %v120 = vshrl.u32 %v119, 7
    %v121 = vsub.s32 0, %v120
    %v122 = vrot.slane %v117, %v121
    %v125 = vsel %vm33, %v112, 0
    %127 = vmatprep.subr.mxu0 0.0
    %128 = vmatpush1.msra.mxu0 0.0
    %129 = vmatprep.subr.mxu0 0.0
    %130 = vmatpush1.msra.mxu0 0.0
    %131 = vmatprep.subr.mxu0 0.0
    %132 = vmatpush1.msra.mxu0 0.0
    %133 = vmatprep.subr.mxu0 0.0
    %134 = vmatpush1.msra.mxu0 0.0
    %135 = vmatprep.subr.mxu0 0.0
    %136 = vmatpush1.msra.mxu0 0.0
    %137 = vmatprep.subr.mxu0 0.0
    %138 = vmatpush1.msra.mxu0 0.0
    %139 = vmatprep.subr.mxu0 0.0
    %140 = vmatpush1.msra.mxu0 0.0
    %141 = vmatprep.subr.mxu0 0.0
    %142 = vmatpush1.msra.mxu0 0.0
    %143 = vmatprep.subr.mxu0 0.0
    %144 = vmatpush1.msra.mxu0 0.0
    %145 = vmatprep.subr.mxu0 0.0
    %146 = vmatpush1.msra.mxu0 0.0
    %147 = vmatprep.subr.mxu0 0.0
    %148 = vmatpush1.msra.mxu0 0.0
    %149 = vmatprep.subr.mxu0 0.0
    %150 = vmatpush1.msra.mxu0 0.0
    %151 = vmatprep.subr.mxu0 0.0
    %152 = vmatpush1.msra.mxu0 %v116
    %153 = vmatprep.subr.mxu0 0.0
    %154 = vmatpush1.msra.mxu0 %v115
    %155 = vmatprep.subr.mxu0 0.0
    %156 = vmatpush1.msra.mxu0 %v114
    %157 = vmatprep.subr.mxu0 0.0
    %158 = vmatpush1.msra.mxu0 %v113
    %159 = vmatprep.subr.mxu0 0.0
    %160 = vmatpush2.msra.mxu0 0.0
    %161 = vmatprep.subr.mxu0 0.0
    %162 = vmatpush2.msra.mxu0 0.0
    %163 = vmatprep.subr.mxu0 0.0
    %164 = vmatpush2.msra.mxu0 0.0
    %165 = vmatprep.subr.mxu0 0.0
    %166 = vmatpush2.msra.mxu0 0.0
    %167 = vmatprep.subr.mxu0 0.0
    %168 = vmatpush2.msra.mxu0 0.0
    %169 = vmatprep.subr.mxu0 0.0
    %170 = vmatpush2.msra.mxu0 0.0
    %171 = vmatprep.subr.mxu0 0.0
    %172 = vmatpush2.msra.mxu0 0.0
    %173 = vmatprep.subr.mxu0 0.0
    %174 = vmatpush2.msra.mxu0 0.0
    %175 = vmatprep.subr.mxu0 0.0
    %176 = vmatpush2.msra.mxu0 0.0
    %177 = vmatprep.subr.mxu0 0.0
    %178 = vmatpush2.msra.mxu0 0.0
    %179 = vmatprep.subr.mxu0 0.0
    %180 = vmatpush2.msra.mxu0 0.0
    %181 = vmatprep.subr.mxu0 0.0
    %182 = vmatpush2.msra.mxu0 0.0
    %183 = vmatprep.subr.mxu0 0.0
    %184 = vmatpush2.msra.mxu0 0.0
    %185 = vmatprep.subr.mxu0 0.0
    %186 = vmatpush2.msra.mxu0 0.0
    %187 = vmatprep.subr.mxu0 0.0
    %188 = vmatpush2.msra.mxu0 0.0
    %189 = vmatprep.subr.mxu0 0.0
    %190 = vmatpush2.msra.mxu0 0.0
    %191 = vmatprep.mubr.f32.mxu0 0.0
    %192 = vmatmul.mubr.f32.gmra.mxu0 %v125
    %v193 = vpop.f32.mrf.mxu0
    %v194 = vadd.f32 %v122, %v193
    %v195 = vpop.f32.mrf.mxu0
    %196 = vdwg.mxu0
    %v197 = vsub.f32 0.0, %v194
    %v198 = vmul.f32 %v197, 1.442695
    %v199 = vpow.pop %v198
    %v200 = vadd.f32 %v199, 1.0
    %v201 = vrcp.pop %v200
    %v202 = vmul.f32 1.0, %v201
    %vm203 = vcmask 130048
    %204 = vst.msk [vmem:[#allocation2] sm:$0xff] %vm203, %v202
    // Predicated region
    $region22: #{tpu_custom_call.1} parent=1 // pred_check
      _
    $region23: #{tpu_custom_call.1} parent=1 // pred_check_branch
      %206 = sbr.rel (0) target = $region25
    $region24: #{tpu_custom_call.1} parent=1 // pred_region
      %s208 = ssub.s32 128, 128
      %209 = vsyncadd [#allocation3], %s208
      %s211 = sshll.u32 [#allocation2], 4
      %s212 = int_to_ptr.vmem [resolvable:$true] %s211
      %214 = dma.vmem_to_hbm [thread:$0]  %s212, 128, %s5, [#allocation3]
    $region25: #{tpu_custom_call.1} parent=1 // pred_fallthru
      _
    // Predicated region
    $region26: #{tpu_custom_call.1} parent=1 // pred_check
      _
    $region27: #{tpu_custom_call.1} parent=1 // pred_check_branch
      %216 = sbr.rel (0) target = $region29
    $region28: #{tpu_custom_call.1} parent=1 // pred_region
      %217 = dma.done [#allocation3], 128
    $region29: #{tpu_custom_call.1} parent=1 // pred_fallthru
      _
    %218 = vsyncpa [#allocation3], 1

</llo_original>
